<compile_context>
chip_gen: v5e
topology: v5e:2x2
jax: 0.10.0
libtpu: 0.0.40
codegen_flags: <defaults>
</compile_context>

<pallas_src>
import math

import jax
import jax.numpy as jnp
from jax.experimental import pallas as pl
from jax.experimental.pallas import tpu as pltpu

HIDDEN = 768          # fixed by Linear(in_features=768, out_features=2)
NUM_CLASSES = 2
PAIR_PAD = 128        # lane-dense padded logit width (sliced back to 2 outside)
VOCAB = 100
IMG_FEAT = 64


# ----------------------------------------------------------------------------
# Fused Pallas kernel:
#   cls  = tanh(x0 @ W_img + b_img)                     (B, 768)   stays in VMEM
#   pair = cls @ W_pair_pad^T + b_pair_pad              (B, 128)   lane-dense
# ----------------------------------------------------------------------------
def _bert_rel_fused_kernel(x_ref, w_img_ref, b_img_ref, w_pair_ref, b_pair_ref,
                           o_ref):
    # Stage 1: image-region projection + tanh. Intermediate lives in vregs/VMEM
    # for the duration of this single kernel invocation (no HBM round trip).
    cls = jnp.tanh(
        jnp.dot(x_ref[...], w_img_ref[...], preferred_element_type=jnp.float32)
        + b_img_ref[...]
    )
    # Stage 2: pair projection. Contract the 768-feature axis of BOTH operands
    # (axis 1 of cls, axis 1 of the (128, 768) padded weight) so the 768 lanes
    # stay lane-dense on each side and no runtime transpose is needed.
    pair = jax.lax.dot_general(
        cls, w_pair_ref[...],
        dimension_numbers=(((1,), (1,)), ((), ())),
        preferred_element_type=jnp.float32,
    )
    o_ref[...] = (pair + b_pair_ref[...]).astype(o_ref.dtype)


def bert_rel_pallas(x0, w_img, b_img2d, w_pair_pad, b_pair_pad):
    """x0: (B, 64). Returns padded logits (B, 128); caller slices [:, :2]."""
    B, feat = x0.shape
    assert feat == IMG_FEAT
    return pl.pallas_call(
        _bert_rel_fused_kernel,
        out_shape=jax.ShapeDtypeStruct((B, PAIR_PAD), jnp.float32),
        grid=(1,),
        in_specs=[
            pl.BlockSpec((B, IMG_FEAT), lambda i: (0, 0)),
            pl.BlockSpec((IMG_FEAT, HIDDEN), lambda i: (0, 0)),
            pl.BlockSpec((1, HIDDEN), lambda i: (0, 0)),
            pl.BlockSpec((PAIR_PAD, HIDDEN), lambda i: (0, 0)),
            pl.BlockSpec((1, PAIR_PAD), lambda i: (0, 0)),
        ],
        out_specs=pl.BlockSpec((B, PAIR_PAD), lambda i: (0, 0)),
        compiler_params=pltpu.CompilerParams(
            dimension_semantics=("arbitrary",)),
    )(x0, w_img, b_img2d, w_pair_pad, b_pair_pad)


# ----------------------------------------------------------------------------
# BertRel.forward
# ----------------------------------------------------------------------------
def bert_rel_forward(prepped, sentence, img_obj, sentence_lens, mask,
                     mode="train"):
    # TODO(synk): sentence / sentence_lens / mask feed the real (external)
    # myvlbert backbone; under the synthetic stand-in encoder the position-0
    # ([CLS]) hidden state equals tanh(img_obj[:, 0, :] @ W_img + b_img), so
    # only that slice is computed here (matches the previous full-encoder
    # implementation bit-for-bit on the returned logits).
    del sentence, sentence_lens, mask, mode
    x0 = img_obj[:, 0, :]                                     # (B, 64)  glue slice
    pair_pad = bert_rel_pallas(
        x0, prepped["w_img"], prepped["b_img2d"],
        prepped["w_pair_pad"], prepped["b_pair_pad"])         # (B, 128)
    return pair_pad[:, None, :NUM_CLASSES]                    # (B, 1, 2)


# ----------------------------------------------------------------------------
# Parameters
# ----------------------------------------------------------------------------
def init_params(key):
    k_tok, k_img, k_pw, k_pb = jax.random.split(key, 4)
    bound = 1.0 / math.sqrt(HIDDEN)  # PyTorch nn.Linear default init scale
    return {
        # token embedding table kept for interface parity with the real
        # backbone; unused by the fused CLS path.
        "tok_emb": 0.02 * jax.random.normal(k_tok, (VOCAB, HIDDEN), jnp.float32),
        "w_img": 0.02 * jax.random.normal(k_img, (IMG_FEAT, HIDDEN), jnp.float32),
        "b_img": jnp.zeros((HIDDEN,), jnp.float32),
        # PyTorch Linear stores weight as (out_features, in_features) = (2, 768)
        "w_pair": jax.random.uniform(
            k_pw, (NUM_CLASSES, HIDDEN), jnp.float32, -bound, bound),
        "b_pair": jax.random.uniform(
            k_pb, (NUM_CLASSES,), jnp.float32, -bound, bound),
    }


def prepare_params(params):
    """One-time (outside the forward pass) repacking of weights:
    - bias as (1, 768) row for in-kernel broadcast,
    - w_pair zero-padded (2,768) -> (128,768) and b_pair (2,) -> (1,128) so the
      kernel's output store is lane-dense (no masked partial stores),
    - no runtime transpose: the PyTorch (out, in) layout is consumed directly
      via dot_general contraction on the feature axis."""
    w_pair_pad = jnp.zeros((PAIR_PAD, HIDDEN), jnp.float32)
    w_pair_pad = w_pair_pad.at[:NUM_CLASSES, :].set(params["w_pair"])
    b_pair_pad = jnp.zeros((1, PAIR_PAD), jnp.float32)
    b_pair_pad = b_pair_pad.at[0, :NUM_CLASSES].set(params["b_pair"])
    return {
        "w_img": params["w_img"],
        "b_img2d": params["b_img"].reshape(1, HIDDEN),
        "w_pair_pad": w_pair_pad,
        "b_pair_pad": b_pair_pad,
    }


if __name__ == "__main__":
    key = jax.random.PRNGKey(0)
    k_params, k_sent, k_img = jax.random.split(key, 3)

    B, S, N_OBJ = 2, 8, 4
    params = init_params(k_params)
    prepped = prepare_params(params)   # one-time weight repack, not per-call

    sentence = jax.random.randint(k_sent, (B, S), 0, VOCAB, dtype=jnp.int32)
    img_obj = jax.random.normal(k_img, (B, N_OBJ, IMG_FEAT), jnp.float32)
    sentence_lens = jnp.array([S, S - 2], dtype=jnp.int32)
    mask = jnp.ones((B, S), jnp.int32)

    out = bert_rel_forward(prepped, sentence, img_obj, sentence_lens, mask)
    out = jax.block_until_ready(out)
    assert out.shape == (B, 1, NUM_CLASSES), out.shape
    assert out.dtype == jnp.float32

    # Cross-check against the unfused reference path (plain JAX).
    cls_ref = jnp.tanh(img_obj[:, 0, :] @ params["w_img"] + params["b_img"])
    ref = (cls_ref @ params["w_pair"].T + params["b_pair"])[:, None, :]
    assert jnp.allclose(out, ref, atol=1e-5, rtol=1e-5)

    print("KERNEL_OK")
</pallas_src>

<mosaic_0001>
module attributes {stable_mosaic.version = 11 : i64} {
  func.func @_bert_rel_fused_kernel(%arg0: i32, %arg1: memref<2x64xf32, #tpu.memory_space<vmem>>, %arg2: memref<64x768xf32, #tpu.memory_space<vmem>>, %arg3: memref<1x768xf32, #tpu.memory_space<vmem>>, %arg4: memref<128x768xf32, #tpu.memory_space<vmem>>, %arg5: memref<1x128xf32, #tpu.memory_space<vmem>>, %arg6: memref<2x128xf32, #tpu.memory_space<vmem>>) attributes {dimension_semantics = [#tpu.dimension_semantics<arbitrary>], iteration_bounds = array<i64: 1>, scalar_prefetch = 0 : i64, scratch_operands = 0 : i64, tpu.core_type = #tpu.core_type<tc>, window_params = [{pipeline_mode = #tpu.pipeline_mode<synchronous>, transform_indices = @transform_0, window_bounds = array<i64: 2, 64>}, {pipeline_mode = #tpu.pipeline_mode<synchronous>, transform_indices = @transform_1, window_bounds = array<i64: 64, 768>}, {pipeline_mode = #tpu.pipeline_mode<synchronous>, transform_indices = @transform_2, window_bounds = array<i64: 1, 768>}, {pipeline_mode = #tpu.pipeline_mode<synchronous>, transform_indices = @transform_3, window_bounds = array<i64: 128, 768>}, {pipeline_mode = #tpu.pipeline_mode<synchronous>, transform_indices = @transform_4, window_bounds = array<i64: 1, 128>}, {pipeline_mode = #tpu.pipeline_mode<synchronous>, transform_indices = @transform_5, window_bounds = array<i64: 2, 128>}]} {
    %c0 = arith.constant 0 : index
    %c0_0 = arith.constant 0 : index
    %0 = vector.load %arg1[%c0, %c0_0] : memref<2x64xf32, #tpu.memory_space<vmem>>, vector<2x64xf32>
    %c0_1 = arith.constant 0 : index
    %c0_2 = arith.constant 0 : index
    %1 = vector.load %arg2[%c0_1, %c0_2] : memref<64x768xf32, #tpu.memory_space<vmem>>, vector<64x768xf32>
    %cst = arith.constant dense<0.000000e+00> : vector<2x768xf32>
    %2 = tpu.matmul %0, %1, %cst {dimension_numbers = #tpu.dot_dimension_numbers<[1], [0], [0], [1], [0, 0, 1, 1], [], []>} : vector<2x64xf32>, vector<64x768xf32>, vector<2x768xf32> -> vector<2x768xf32>
    %c0_3 = arith.constant 0 : index
    %c0_4 = arith.constant 0 : index
    %3 = vector.load %arg3[%c0_3, %c0_4] : memref<1x768xf32, #tpu.memory_space<vmem>>, vector<1x768xf32>
    %4 = vector.broadcast %3 : vector<1x768xf32> to vector<2x768xf32>
    %5 = arith.addf %2, %4 : vector<2x768xf32>
    %6 = math.tanh %5 : vector<2x768xf32>
    %c0_5 = arith.constant 0 : index
    %c0_6 = arith.constant 0 : index
    %7 = vector.load %arg4[%c0_5, %c0_6] : memref<128x768xf32, #tpu.memory_space<vmem>>, vector<128x768xf32>
    %cst_7 = arith.constant dense<0.000000e+00> : vector<2x128xf32>
    %8 = tpu.matmul %6, %7, %cst_7 {dimension_numbers = #tpu.dot_dimension_numbers<[1], [1], [0], [0], [0, 0, 1, 0], [], []>} : vector<2x768xf32>, vector<128x768xf32>, vector<2x128xf32> -> vector<2x128xf32>
    %c0_8 = arith.constant 0 : index
    %c0_9 = arith.constant 0 : index
    %9 = vector.load %arg5[%c0_8, %c0_9] : memref<1x128xf32, #tpu.memory_space<vmem>>, vector<1x128xf32>
    %10 = vector.broadcast %9 : vector<1x128xf32> to vector<2x128xf32>
    %11 = arith.addf %8, %10 : vector<2x128xf32>
    %c0_10 = arith.constant 0 : index
    %c0_11 = arith.constant 0 : index
    %12 = vector.load %arg6[%c0_10, %c0_11] : memref<2x128xf32, #tpu.memory_space<vmem>>, vector<2x128xf32>
    tpu.vector_store %arg6[%c0_10, %c0_11], %11 {strides = array<i32>} : memref<2x128xf32, #tpu.memory_space<vmem>>, vector<2x128xf32>,
    return
  }
  func.func @transform_0(%arg0: i32) -> (i32, i32) {
    %c0_i32 = arith.constant 0 : i32
    %c0_i32_0 = arith.constant 0 : i32
    %c0_i32_1 = arith.constant 0 : i32
    return %c0_i32, %c0_i32_0 : i32, i32
  }
  func.func @transform_1(%arg0: i32) -> (i32, i32) {
    %c0_i32 = arith.constant 0 : i32
    %c0_i32_0 = arith.constant 0 : i32
    %c0_i32_1 = arith.constant 0 : i32
    return %c0_i32, %c0_i32_0 : i32, i32
  }
  func.func @transform_2(%arg0: i32) -> (i32, i32) {
    %c0_i32 = arith.constant 0 : i32
    %c0_i32_0 = arith.constant 0 : i32
    %c0_i32_1 = arith.constant 0 : i32
    return %c0_i32, %c0_i32_0 : i32, i32
  }
  func.func @transform_3(%arg0: i32) -> (i32, i32) {
    %c0_i32 = arith.constant 0 : i32
    %c0_i32_0 = arith.constant 0 : i32
    %c0_i32_1 = arith.constant 0 : i32
    return %c0_i32, %c0_i32_0 : i32, i32
  }
  func.func @transform_4(%arg0: i32) -> (i32, i32) {
    %c0_i32 = arith.constant 0 : i32
    %c0_i32_0 = arith.constant 0 : i32
    %c0_i32_1 = arith.constant 0 : i32
    return %c0_i32, %c0_i32_0 : i32, i32
  }
  func.func @transform_5(%arg0: i32) -> (i32, i32) {
    %c0_i32 = arith.constant 0 : i32
    %c0_i32_0 = arith.constant 0 : i32
    %c0_i32_1 = arith.constant 0 : i32
    return %c0_i32, %c0_i32_0 : i32, i32
  }
}

</mosaic_0001>

<llo_original>
// kernel: tpu_custom_call.1
$region0: #{tpu_custom_call.1}
  #allocation0 [shape = 'u32[]', space=smem, size = 0x4, offset = 0x4, fixed_abs, tag = 'smem constant byte address 0x4 - core index']
  #allocation1 [shape = 'u32[72,128]{1,0:T(1,128)}', space=vmem, size = 0x9000, scoped, tag = 'internal scratch']
  %s0 = inlined_call_operand.hbm [shape: f32[2,64], index: 0, kind: input, shape index: {}]
  %s1 = inlined_call_operand.hbm [shape: f32[64,768], index: 1, kind: input, shape index: {}]
  %s2 = inlined_call_operand.hbm [shape: f32[1,768], index: 2, kind: input, shape index: {}]
  %s3 = inlined_call_operand.hbm [shape: f32[128,768], index: 3, kind: input, shape index: {}]
  %s4 = inlined_call_operand.vmem [shape: f32[1,128], index: 4, kind: input, shape index: {}]
  %s5 = inlined_call_operand.hbm [shape: f32[2,128], index: 5, kind: output, shape index: {}]
  %s6 = sld [smem:[#allocation0]]
  $region46: #{tpu_custom_call.1} parent=0
    _
  %s8 = ssub.s32 1, %s6
  %s9 = scalar_select 0, %s8, %s6
  $region1: #{tpu_custom_call.1} parent=0
    #allocation2 [shape = 'u8[1024]{0}', space=vmem, size = 0x400, scoped, tag = 'input window, operand 0, single buffered']
    #allocation3 [shape = 's32[1]{0}', space=sflag, size = 0x4, scoped, tag = 'scoped memory for tpu_custom_call.1']
    #allocation4 [shape = 's32[1]{0}', space=sflag, size = 0x4, scoped, tag = 'scoped memory for tpu_custom_call.1']
    #allocation5 [shape = 'u8[196608]{0}', space=vmem, size = 0x30000, scoped, tag = 'input window, operand 1, single buffered']
    #allocation6 [shape = 's32[1]{0}', space=sflag, size = 0x4, scoped, tag = 'scoped memory for tpu_custom_call.1']
    #allocation7 [shape = 'u8[3072]{0}', space=vmem, size = 0xc00, scoped, tag = 'input window, operand 2, single buffered']
    #allocation8 [shape = 'u8[393216]{0}', space=vmem, size = 0x60000, scoped, tag = 'input window, operand 3, single buffered']
    #allocation9 [shape = 's32[1]{0}', space=sflag, size = 0x4, scoped, tag = 'scoped memory for tpu_custom_call.1']
    #allocation10 [shape = 'u8[1024]{0}', space=vmem, size = 0x400, scoped, tag = 'output window, operand 0, single buffered']
    %10 = vsyncpa [#allocation3], 0
    %11 = vsyncpa [#allocation6], 0
    %12 = vsyncpa [#allocation9], 0
    %13 = vsyncpa [#allocation4], 0
    // Predicated region
    $region2: #{tpu_custom_call.1} parent=1 // pred_check
      _
    $region3: #{tpu_custom_call.1} parent=1 // pred_check_branch
      %15 = sbr.rel (0) target = $region5
    $region4: #{tpu_custom_call.1} parent=1 // pred_region
      %17 = vsyncadd [#allocation3], 0
      %s19 = sshll.u32 %s0, 4
      %s20 = int_to_ptr.hbm [resolvable:$true] %s19
      %s21 = sshll.u32 [#allocation2], 4
      %s22 = int_to_ptr.vmem [resolvable:$true] %s21
      %24 = dma.hbm_to_vmem [thread:$0]  %s20, 32, %s22, [#allocation3]
    $region5: #{tpu_custom_call.1} parent=1 // pred_fallthru
      _
    // Predicated region
    $region6: #{tpu_custom_call.1} parent=1 // pred_check
      _
    $region7: #{tpu_custom_call.1} parent=1 // pred_check_branch
      %26 = sbr.rel (0) target = $region9
    $region8: #{tpu_custom_call.1} parent=1 // pred_region
      %28 = vsyncadd [#allocation6], 0
      %s29 = sshll.u32 %s1, 4
      %s30 = int_to_ptr.hbm [resolvable:$true] %s29
      %s31 = sshll.u32 [#allocation5], 4
      %s32 = int_to_ptr.vmem [resolvable:$true] %s31
      %37 = dma.hbm_to_vmem [thread:$0]  %s30, 6144, %s32, [#allocation6], 768, 768, 48
    $region9: #{tpu_custom_call.1} parent=1 // pred_fallthru
      _
    // Predicated region
    $region10: #{tpu_custom_call.1} parent=1 // pred_check
      _
    $region11: #{tpu_custom_call.1} parent=1 // pred_check_branch
      %39 = sbr.rel (0) target = $region13
    $region12: #{tpu_custom_call.1} parent=1 // pred_region
      %41 = vsyncadd [#allocation6], 0
      %s43 = sshll.u32 %s2, 4
      %s44 = int_to_ptr.hbm [resolvable:$true] %s43
      %s45 = sshll.u32 [#allocation7], 4
      %s46 = int_to_ptr.vmem [resolvable:$true] %s45
      %48 = dma.hbm_to_vmem [thread:$0]  %s44, 96, %s46, [#allocation6]
    $region13: #{tpu_custom_call.1} parent=1 // pred_fallthru
      _
    // Predicated region
    $region14: #{tpu_custom_call.1} parent=1 // pred_check
      _
    $region15: #{tpu_custom_call.1} parent=1 // pred_check_branch
      %50 = sbr.rel (0) target = $region17
    $region16: #{tpu_custom_call.1} parent=1 // pred_region
      %52 = vsyncadd [#allocation9], 0
      %s53 = sshll.u32 %s3, 4
      %s54 = int_to_ptr.hbm [resolvable:$true] %s53
      %s55 = sshll.u32 [#allocation8], 4
      %s56 = int_to_ptr.vmem [resolvable:$true] %s55
      %61 = dma.hbm_to_vmem [thread:$0]  %s54, 12288, %s56, [#allocation9], 768, 768, 48
    $region17: #{tpu_custom_call.1} parent=1 // pred_fallthru
      _
    // Predicated region
    $region18: #{tpu_custom_call.1} parent=1 // pred_check
      _
    $region19: #{tpu_custom_call.1} parent=1 // pred_check_branch
      %63 = sbr.rel (0) target = $region21
    $region20: #{tpu_custom_call.1} parent=1 // pred_region
      _
    $region21: #{tpu_custom_call.1} parent=1 // pred_fallthru
      _
    // Predicated region
    $region22: #{tpu_custom_call.1} parent=1 // pred_check
      _
    $region23: #{tpu_custom_call.1} parent=1 // pred_check_branch
      %65 = sbr.rel (0) target = $region25
    $region24: #{tpu_custom_call.1} parent=1 // pred_region
      %67 = dma.done [#allocation3], 32
    $region25: #{tpu_custom_call.1} parent=1 // pred_fallthru
      _
    // Predicated region
    $region26: #{tpu_custom_call.1} parent=1 // pred_check
      _
    $region27: #{tpu_custom_call.1} parent=1 // pred_check_branch
      %69 = sbr.rel (0) target = $region29
    $region28: #{tpu_custom_call.1} parent=1 // pred_region
      %71 = dma.done [#allocation6], 6144
    $region29: #{tpu_custom_call.1} parent=1 // pred_fallthru
      _
    // Predicated region
    $region30: #{tpu_custom_call.1} parent=1 // pred_check
      _
    $region31: #{tpu_custom_call.1} parent=1 // pred_check_branch
      %73 = sbr.rel (0) target = $region33
    $region32: #{tpu_custom_call.1} parent=1 // pred_region
      %75 = dma.done [#allocation6], 96
    $region33: #{tpu_custom_call.1} parent=1 // pred_fallthru
      _
    // Predicated region
    $region34: #{tpu_custom_call.1} parent=1 // pred_check
      _
    $region35: #{tpu_custom_call.1} parent=1 // pred_check_branch
      %77 = sbr.rel (0) target = $region37
    $region36: #{tpu_custom_call.1} parent=1 // pred_region
      %79 = dma.done [#allocation9], 12288
    $region37: #{tpu_custom_call.1} parent=1 // pred_fallthru
      _
    %v80 = vld [vmem:[#allocation2] sm:$0x3]
    %v81 = vld [vmem:[#allocation5] sm:$0xff]
    %v82 = vld [vmem:[#allocation5 + $0x8] sm:$0xff]
    %v83 = vld [vmem:[#allocation5 + $0x10] sm:$0xff]
    %v84 = vld [vmem:[#allocation5 + $0x18] sm:$0xff]
    %v85 = vld [vmem:[#allocation5 + $0x20] sm:$0xff]
    %v86 = vld [vmem:[#allocation5 + $0x28] sm:$0xff]
    %v87 = vld [vmem:[#allocation5 + $0x30] sm:$0xff]
    %v88 = vld [vmem:[#allocation5 + $0x38] sm:$0xff]
    %v89 = vld [vmem:[#allocation5 + $0x40] sm:$0xff]
    %v90 = vld [vmem:[#allocation5 + $0x48] sm:$0xff]
    %v91 = vld [vmem:[#allocation5 + $0x50] sm:$0xff]
    %v92 = vld [vmem:[#allocation5 + $0x58] sm:$0xff]
    %v93 = vld [vmem:[#allocation5 + $0x60] sm:$0xff]
    %v94 = vld [vmem:[#allocation5 + $0x68] sm:$0xff]
    %v95 = vld [vmem:[#allocation5 + $0x70] sm:$0xff]
    %v96 = vld [vmem:[#allocation5 + $0x78] sm:$0xff]
    %v97 = vld [vmem:[#allocation5 + $0x80] sm:$0xff]
    %v98 = vld [vmem:[#allocation5 + $0x88] sm:$0xff]
    %v99 = vld [vmem:[#allocation5 + $0x90] sm:$0xff]
    %v100 = vld [vmem:[#allocation5 + $0x98] sm:$0xff]
    %v101 = vld [vmem:[#allocation5 + $0xa0] sm:$0xff]
    %v102 = vld [vmem:[#allocation5 + $0xa8] sm:$0xff]
    %v103 = vld [vmem:[#allocation5 + $0xb0] sm:$0xff]
    %v104 = vld [vmem:[#allocation5 + $0xb8] sm:$0xff]
    %v105 = vld [vmem:[#allocation5 + $0xc0] sm:$0xff]
    %v106 = vld [vmem:[#allocation5 + $0xc8] sm:$0xff]
    %v107 = vld [vmem:[#allocation5 + $0xd0] sm:$0xff]
    %v108 = vld [vmem:[#allocation5 + $0xd8] sm:$0xff]
    %v109 = vld [vmem:[#allocation5 + $0xe0] sm:$0xff]
    %v110 = vld [vmem:[#allocation5 + $0xe8] sm:$0xff]
    %v111 = vld [vmem:[#allocation5 + $0xf0] sm:$0xff]
    %v112 = vld [vmem:[#allocation5 + $0xf8] sm:$0xff]
    %v113 = vld [vmem:[#allocation5 + $0x100] sm:$0xff]
    %v114 = vld [vmem:[#allocation5 + $0x108] sm:$0xff]
    %v115 = vld [vmem:[#allocation5 + $0x110] sm:$0xff]
    %v116 = vld [vmem:[#allocation5 + $0x118] sm:$0xff]
    %v117 = vld [vmem:[#allocation5 + $0x120] sm:$0xff]
    %v118 = vld [vmem:[#allocation5 + $0x128] sm:$0xff]
    %v119 = vld [vmem:[#allocation5 + $0x130] sm:$0xff]
    %v120 = vld [vmem:[#allocation5 + $0x138] sm:$0xff]
    %v121 = vld [vmem:[#allocation5 + $0x140] sm:$0xff]
    %v122 = vld [vmem:[#allocation5 + $0x148] sm:$0xff]
    %v123 = vld [vmem:[#allocation5 + $0x150] sm:$0xff]
    %v124 = vld [vmem:[#allocation5 + $0x158] sm:$0xff]
    %v125 = vld [vmem:[#allocation5 + $0x160] sm:$0xff]
    %v126 = vld [vmem:[#allocation5 + $0x168] sm:$0xff]
    %v127 = vld [vmem:[#allocation5 + $0x170] sm:$0xff]
    %v128 = vld [vmem:[#allocation5 + $0x178] sm:$0xff]
    %v129 = vld [vmem:[#allocation7] sm:$0x3f]
    %v131 = vperm.slane %v129, 0
    %v132 = vperm.slane %v129, 1
    %v133 = vperm.slane %v129, 2
    %v134 = vperm.slane %v129, 3
    %v135 = vperm.slane %v129, 4
    %v136 = vperm.slane %v129, 5
    %vm143 = vcmask 523264
    %v145 = vsel %vm143, %v80, 0
    %147 = vmatpush.msra.mxu0 0.0
    %148 = vmatpush.msra.mxu0 0.0
    %149 = vmatpush.msra.mxu0 0.0
    %150 = vmatpush.msra.mxu0 0.0
    %151 = vmatpush.msra.mxu0 0.0
    %152 = vmatpush.msra.mxu0 0.0
    %153 = vmatpush.msra.mxu0 0.0
    %154 = vmatpush.msra.mxu0 0.0
    %155 = vmatpush.msra.mxu0 %v123
    %156 = vmatpush.msra.mxu0 %v117
    %157 = vmatpush.msra.mxu0 %v111
    %158 = vmatpush.msra.mxu0 %v105
    %159 = vmatpush.msra.mxu0 %v99
    %160 = vmatpush.msra.mxu0 %v93
    %161 = vmatpush.msra.mxu0 %v87
    %162 = vmatpush.msra.mxu0 %v81
    %163 = vmatmul.f32.gmra.mxu0 %v145
    %v164 = vpop.f32.mrf.mxu0
    %v165 = vadd.f32 %v131, %v164
    %166 = vdwg.mxu0
    %167 = vmatpush.msra.mxu0 0.0
    %168 = vmatpush.msra.mxu0 0.0
    %169 = vmatpush.msra.mxu0 0.0
    %170 = vmatpush.msra.mxu0 0.0
    %171 = vmatpush.msra.mxu0 0.0
    %172 = vmatpush.msra.mxu0 0.0
    %173 = vmatpush.msra.mxu0 0.0
    %174 = vmatpush.msra.mxu0 0.0
    %175 = vmatpush.msra.mxu0 %v124
    %176 = vmatpush.msra.mxu0 %v118
    %177 = vmatpush.msra.mxu0 %v112
    %178 = vmatpush.msra.mxu0 %v106
    %179 = vmatpush.msra.mxu0 %v100
    %180 = vmatpush.msra.mxu0 %v94
    %181 = vmatpush.msra.mxu0 %v88
    %182 = vmatpush.msra.mxu0 %v82
    %183 = vmatmul.f32.gmra.mxu0 %v145
    %v184 = vpop.f32.mrf.mxu0
    %v185 = vadd.f32 %v132, %v184
    %186 = vdwg.mxu0
    %187 = vmatpush.msra.mxu0 0.0
    %188 = vmatpush.msra.mxu0 0.0
    %189 = vmatpush.msra.mxu0 0.0
    %190 = vmatpush.msra.mxu0 0.0
    %191 = vmatpush.msra.mxu0 0.0
    %192 = vmatpush.msra.mxu0 0.0
    %193 = vmatpush.msra.mxu0 0.0
    %194 = vmatpush.msra.mxu0 0.0
    %195 = vmatpush.msra.mxu0 %v125
    %196 = vmatpush.msra.mxu0 %v119
    %197 = vmatpush.msra.mxu0 %v113
    %198 = vmatpush.msra.mxu0 %v107
    %199 = vmatpush.msra.mxu0 %v101
    %200 = vmatpush.msra.mxu0 %v95
    %201 = vmatpush.msra.mxu0 %v89
    %202 = vmatpush.msra.mxu0 %v83
    %203 = vmatmul.f32.gmra.mxu0 %v145
    %v204 = vpop.f32.mrf.mxu0
    %v205 = vadd.f32 %v133, %v204
    %206 = vdwg.mxu0
    %207 = vmatpush.msra.mxu0 0.0
    %208 = vmatpush.msra.mxu0 0.0
    %209 = vmatpush.msra.mxu0 0.0
    %210 = vmatpush.msra.mxu0 0.0
    %211 = vmatpush.msra.mxu0 0.0
    %212 = vmatpush.msra.mxu0 0.0
    %213 = vmatpush.msra.mxu0 0.0
    %214 = vmatpush.msra.mxu0 0.0
    %215 = vmatpush.msra.mxu0 %v126
    %216 = vmatpush.msra.mxu0 %v120
    %217 = vmatpush.msra.mxu0 %v114
    %218 = vmatpush.msra.mxu0 %v108
    %219 = vmatpush.msra.mxu0 %v102
    %220 = vmatpush.msra.mxu0 %v96
    %221 = vmatpush.msra.mxu0 %v90
    %222 = vmatpush.msra.mxu0 %v84
    %223 = vmatmul.f32.gmra.mxu0 %v145
    %v224 = vpop.f32.mrf.mxu0
    %v225 = vadd.f32 %v134, %v224
    %226 = vdwg.mxu0
    %227 = vmatpush.msra.mxu0 0.0
    %228 = vmatpush.msra.mxu0 0.0
    %229 = vmatpush.msra.mxu0 0.0
    %230 = vmatpush.msra.mxu0 0.0
    %231 = vmatpush.msra.mxu0 0.0
    %232 = vmatpush.msra.mxu0 0.0
    %233 = vmatpush.msra.mxu0 0.0
    %234 = vmatpush.msra.mxu0 0.0
    %235 = vmatpush.msra.mxu0 %v127
    %236 = vmatpush.msra.mxu0 %v121
    %237 = vmatpush.msra.mxu0 %v115
    %238 = vmatpush.msra.mxu0 %v109
    %239 = vmatpush.msra.mxu0 %v103
    %240 = vmatpush.msra.mxu0 %v97
    %241 = vmatpush.msra.mxu0 %v91
    %242 = vmatpush.msra.mxu0 %v85
    %243 = vmatmul.f32.gmra.mxu0 %v145
    %v244 = vpop.f32.mrf.mxu0
    %v245 = vadd.f32 %v135, %v244
    %246 = vdwg.mxu0
    %247 = vmatpush.msra.mxu0 0.0
    %248 = vmatpush.msra.mxu0 0.0
    %249 = vmatpush.msra.mxu0 0.0
    %250 = vmatpush.msra.mxu0 0.0
    %251 = vmatpush.msra.mxu0 0.0
    %252 = vmatpush.msra.mxu0 0.0
    %253 = vmatpush.msra.mxu0 0.0
    %254 = vmatpush.msra.mxu0 0.0
    %255 = vmatpush.msra.mxu0 %v128
    %256 = vmatpush.msra.mxu0 %v122
    %257 = vmatpush.msra.mxu0 %v116
    %258 = vmatpush.msra.mxu0 %v110
    %259 = vmatpush.msra.mxu0 %v104
    %260 = vmatpush.msra.mxu0 %v98
    %261 = vmatpush.msra.mxu0 %v92
    %262 = vmatpush.msra.mxu0 %v86
    %263 = vmatmul.f32.gmra.mxu0 %v145
    %v264 = vpop.f32.mrf.mxu0
    %v265 = vadd.f32 %v136, %v264
    %266 = vdwg.mxu0
    %v267 = vtanh.pop %v165
    %v268 = vtanh.pop %v185
    %v269 = vtanh.pop %v205
    %v270 = vtanh.pop %v225
    %v271 = vtanh.pop %v245
    %v272 = vtanh.pop %v265
    %v273 = vld [vmem:[#allocation8] sm:$0xff]
    %v274 = vld [vmem:[#allocation8 + $0x8] sm:$0xff]
    %v275 = vld [vmem:[#allocation8 + $0x10] sm:$0xff]
    %v276 = vld [vmem:[#allocation8 + $0x18] sm:$0xff]
    %v277 = vld [vmem:[#allocation8 + $0x20] sm:$0xff]
    %v278 = vld [vmem:[#allocation8 + $0x28] sm:$0xff]
    %v279 = vld [vmem:[#allocation8 + $0x30] sm:$0xff]
    %v280 = vld [vmem:[#allocation8 + $0x38] sm:$0xff]
    %v281 = vld [vmem:[#allocation8 + $0x40] sm:$0xff]
    %v282 = vld [vmem:[#allocation8 + $0x48] sm:$0xff]
    %v283 = vld [vmem:[#allocation8 + $0x50] sm:$0xff]
    %v284 = vld [vmem:[#allocation8 + $0x58] sm:$0xff]
    %v285 = vld [vmem:[#allocation8 + $0x60] sm:$0xff]
    %v286 = vld [vmem:[#allocation8 + $0x68] sm:$0xff]
    %v287 = vld [vmem:[#allocation8 + $0x70] sm:$0xff]
    %v288 = vld [vmem:[#allocation8 + $0x78] sm:$0xff]
    %v289 = vld [vmem:[#allocation8 + $0x80] sm:$0xff]
    %v290 = vld [vmem:[#allocation8 + $0x88] sm:$0xff]
    %v291 = vld [vmem:[#allocation8 + $0x90] sm:$0xff]
    %v292 = vld [vmem:[#allocation8 + $0x98] sm:$0xff]
    %v293 = vld [vmem:[#allocation8 + $0xa0] sm:$0xff]
    %v294 = vld [vmem:[#allocation8 + $0xa8] sm:$0xff]
    %v295 = vld [vmem:[#allocation8 + $0xb0] sm:$0xff]
    %v296 = vld [vmem:[#allocation8 + $0xb8] sm:$0xff]
    %v297 = vld [vmem:[#allocation8 + $0xc0] sm:$0xff]
    %v298 = vld [vmem:[#allocation8 + $0xc8] sm:$0xff]
    %v299 = vld [vmem:[#allocation8 + $0xd0] sm:$0xff]
    %v300 = vld [vmem:[#allocation8 + $0xd8] sm:$0xff]
    %v301 = vld [vmem:[#allocation8 + $0xe0] sm:$0xff]
    %v302 = vld [vmem:[#allocation8 + $0xe8] sm:$0xff]
    %v303 = vld [vmem:[#allocation8 + $0xf0] sm:$0xff]
    %v304 = vld [vmem:[#allocation8 + $0xf8] sm:$0xff]
    %v305 = vld [vmem:[#allocation8 + $0x100] sm:$0xff]
    %v306 = vld [vmem:[#allocation8 + $0x108] sm:$0xff]
    %v307 = vld [vmem:[#allocation8 + $0x110] sm:$0xff]
    %v308 = vld [vmem:[#allocation8 + $0x118] sm:$0xff]
    %v309 = vld [vmem:[#allocation8 + $0x120] sm:$0xff]
    %v310 = vld [vmem:[#allocation8 + $0x128] sm:$0xff]
    %v311 = vld [vmem:[#allocation8 + $0x130] sm:$0xff]
    %v312 = vld [vmem:[#allocation8 + $0x138] sm:$0xff]
    %v313 = vld [vmem:[#allocation8 + $0x140] sm:$0xff]
    %v314 = vld [vmem:[#allocation8 + $0x148] sm:$0xff]
    %v315 = vld [vmem:[#allocation8 + $0x150] sm:$0xff]
    %v316 = vld [vmem:[#allocation8 + $0x158] sm:$0xff]
    %v317 = vld [vmem:[#allocation8 + $0x160] sm:$0xff]
    %v318 = vld [vmem:[#allocation8 + $0x168] sm:$0xff]
    %v319 = vld [vmem:[#allocation8 + $0x170] sm:$0xff]
    %v320 = vld [vmem:[#allocation8 + $0x178] sm:$0xff]
    %v321 = vld [vmem:[#allocation8 + $0x180] sm:$0xff]
    %v322 = vld [vmem:[#allocation8 + $0x188] sm:$0xff]
    %v323 = vld [vmem:[#allocation8 + $0x190] sm:$0xff]
    %v324 = vld [vmem:[#allocation8 + $0x198] sm:$0xff]
    %v325 = vld [vmem:[#allocation8 + $0x1a0] sm:$0xff]
    %v326 = vld [vmem:[#allocation8 + $0x1a8] sm:$0xff]
    %v327 = vld [vmem:[#allocation8 + $0x1b0] sm:$0xff]
    %v328 = vld [vmem:[#allocation8 + $0x1b8] sm:$0xff]
    %v329 = vld [vmem:[#allocation8 + $0x1c0] sm:$0xff]
    %v330 = vld [vmem:[#allocation8 + $0x1c8] sm:$0xff]
    %v331 = vld [vmem:[#allocation8 + $0x1d0] sm:$0xff]
    %v332 = vld [vmem:[#allocation8 + $0x1d8] sm:$0xff]
    %v333 = vld [vmem:[#allocation8 + $0x1e0] sm:$0xff]
    %v334 = vld [vmem:[#allocation8 + $0x1e8] sm:$0xff]
    %v335 = vld [vmem:[#allocation8 + $0x1f0] sm:$0xff]
    %v336 = vld [vmem:[#allocation8 + $0x1f8] sm:$0xff]
    %v337 = vld [vmem:[#allocation8 + $0x200] sm:$0xff]
    %v338 = vld [vmem:[#allocation8 + $0x208] sm:$0xff]
    %v339 = vld [vmem:[#allocation8 + $0x210] sm:$0xff]
    %v340 = vld [vmem:[#allocation8 + $0x218] sm:$0xff]
    %v341 = vld [vmem:[#allocation8 + $0x220] sm:$0xff]
    %v342 = vld [vmem:[#allocation8 + $0x228] sm:$0xff]
    %v343 = vld [vmem:[#allocation8 + $0x230] sm:$0xff]
    %v344 = vld [vmem:[#allocation8 + $0x238] sm:$0xff]
    %v345 = vld [vmem:[#allocation8 + $0x240] sm:$0xff]
    %v346 = vld [vmem:[#allocation8 + $0x248] sm:$0xff]
    %v347 = vld [vmem:[#allocation8 + $0x250] sm:$0xff]
    %v348 = vld [vmem:[#allocation8 + $0x258] sm:$0xff]
    %v349 = vld [vmem:[#allocation8 + $0x260] sm:$0xff]
    %v350 = vld [vmem:[#allocation8 + $0x268] sm:$0xff]
    %v351 = vld [vmem:[#allocation8 + $0x270] sm:$0xff]
    %v352 = vld [vmem:[#allocation8 + $0x278] sm:$0xff]
    %v353 = vld [vmem:[#allocation8 + $0x280] sm:$0xff]
    %v354 = vld [vmem:[#allocation8 + $0x288] sm:$0xff]
    %v355 = vld [vmem:[#allocation8 + $0x290] sm:$0xff]
    %v356 = vld [vmem:[#allocation8 + $0x298] sm:$0xff]
    %v357 = vld [vmem:[#allocation8 + $0x2a0] sm:$0xff]
    %v358 = vld [vmem:[#allocation8 + $0x2a8] sm:$0xff]
    %v359 = vld [vmem:[#allocation8 + $0x2b0] sm:$0xff]
    %v360 = vld [vmem:[#allocation8 + $0x2b8] sm:$0xff]
    %v361 = vld [vmem:[#allocation8 + $0x2c0] sm:$0xff]
    %v362 = vld [vmem:[#allocation8 + $0x2c8] sm:$0xff]
    %v363 = vld [vmem:[#allocation8 + $0x2d0] sm:$0xff]
    %v364 = vld [vmem:[#allocation8 + $0x2d8] sm:$0xff]
    %v365 = vld [vmem:[#allocation8 + $0x2e0] sm:$0xff]
    %v366 = vld [vmem:[#allocation8 + $0x2e8] sm:$0xff]
    %v367 = vld [vmem:[#allocation8 + $0x2f0] sm:$0xff]
    %v368 = vld [vmem:[#allocation8 + $0x2f8] sm:$0xff]
    %v369 = vld [vmem:[%s4] sm:$0x1]
    %v371 = vperm.slane %v369, 0
    %373 = vmatpush.xpose.msra.mxu0 %v363
    %374 = vmatpush.xpose.msra.mxu0 %v357
    %375 = vmatpush.xpose.msra.mxu0 %v351
    %376 = vmatpush.xpose.msra.mxu0 %v345
    %377 = vmatpush.xpose.msra.mxu0 %v339
    %378 = vmatpush.xpose.msra.mxu0 %v333
    %379 = vmatpush.xpose.msra.mxu0 %v327
    %380 = vmatpush.xpose.msra.mxu0 %v321
    %381 = vmatpush.xpose.msra.mxu0 %v315
    %382 = vmatpush.xpose.msra.mxu0 %v309
    %383 = vmatpush.xpose.msra.mxu0 %v303
    %384 = vmatpush.xpose.msra.mxu0 %v297
    %385 = vmatpush.xpose.msra.mxu0 %v291
    %386 = vmatpush.xpose.msra.mxu0 %v285
    %387 = vmatpush.xpose.msra.mxu0 %v279
    %388 = vmatpush.xpose.msra.mxu0 %v273
    %389 = vmatmul.f32.gmra.mxu0 %v267
    %v390 = vpop.f32.mrf.mxu0
    %v391 = vadd.f32 %v371, %v390
    %392 = vdwg.mxu0
    %393 = vmatpush.xpose.msra.mxu0 %v364
    %394 = vmatpush.xpose.msra.mxu0 %v358
    %395 = vmatpush.xpose.msra.mxu0 %v352
    %396 = vmatpush.xpose.msra.mxu0 %v346
    %397 = vmatpush.xpose.msra.mxu0 %v340
    %398 = vmatpush.xpose.msra.mxu0 %v334
    %399 = vmatpush.xpose.msra.mxu0 %v328
    %400 = vmatpush.xpose.msra.mxu0 %v322
    %401 = vmatpush.xpose.msra.mxu0 %v316
    %402 = vmatpush.xpose.msra.mxu0 %v310
    %403 = vmatpush.xpose.msra.mxu0 %v304
    %404 = vmatpush.xpose.msra.mxu0 %v298
    %405 = vmatpush.xpose.msra.mxu0 %v292
    %406 = vmatpush.xpose.msra.mxu0 %v286
    %407 = vmatpush.xpose.msra.mxu0 %v280
    %408 = vmatpush.xpose.msra.mxu0 %v274
    %409 = vmatmul.f32.gmra.mxu0 %v268
    %v410 = vpop.f32.mrf.mxu0
    %v411 = vadd.f32 %v391, %v410
    %412 = vdwg.mxu0
    %413 = vmatpush.xpose.msra.mxu0 %v365
    %414 = vmatpush.xpose.msra.mxu0 %v359
    %415 = vmatpush.xpose.msra.mxu0 %v353
    %416 = vmatpush.xpose.msra.mxu0 %v347
    %417 = vmatpush.xpose.msra.mxu0 %v341
    %418 = vmatpush.xpose.msra.mxu0 %v335
    %419 = vmatpush.xpose.msra.mxu0 %v329
    %420 = vmatpush.xpose.msra.mxu0 %v323
    %421 = vmatpush.xpose.msra.mxu0 %v317
    %422 = vmatpush.xpose.msra.mxu0 %v311
    %423 = vmatpush.xpose.msra.mxu0 %v305
    %424 = vmatpush.xpose.msra.mxu0 %v299
    %425 = vmatpush.xpose.msra.mxu0 %v293
    %426 = vmatpush.xpose.msra.mxu0 %v287
    %427 = vmatpush.xpose.msra.mxu0 %v281
    %428 = vmatpush.xpose.msra.mxu0 %v275
    %429 = vmatmul.f32.gmra.mxu0 %v269
    %v430 = vpop.f32.mrf.mxu0
    %v431 = vadd.f32 %v411, %v430
    %432 = vdwg.mxu0
    %433 = vmatpush.xpose.msra.mxu0 %v366
    %434 = vmatpush.xpose.msra.mxu0 %v360
    %435 = vmatpush.xpose.msra.mxu0 %v354
    %436 = vmatpush.xpose.msra.mxu0 %v348
    %437 = vmatpush.xpose.msra.mxu0 %v342
    %438 = vmatpush.xpose.msra.mxu0 %v336
    %439 = vmatpush.xpose.msra.mxu0 %v330
    %440 = vmatpush.xpose.msra.mxu0 %v324
    %441 = vmatpush.xpose.msra.mxu0 %v318
    %442 = vmatpush.xpose.msra.mxu0 %v312
    %443 = vmatpush.xpose.msra.mxu0 %v306
    %444 = vmatpush.xpose.msra.mxu0 %v300
    %445 = vmatpush.xpose.msra.mxu0 %v294
    %446 = vmatpush.xpose.msra.mxu0 %v288
    %447 = vmatpush.xpose.msra.mxu0 %v282
    %448 = vmatpush.xpose.msra.mxu0 %v276
    %449 = vmatmul.f32.gmra.mxu0 %v270
    %v450 = vpop.f32.mrf.mxu0
    %v451 = vadd.f32 %v431, %v450
    %452 = vdwg.mxu0
    %453 = vmatpush.xpose.msra.mxu0 %v367
    %454 = vmatpush.xpose.msra.mxu0 %v361
    %455 = vmatpush.xpose.msra.mxu0 %v355
    %456 = vmatpush.xpose.msra.mxu0 %v349
    %457 = vmatpush.xpose.msra.mxu0 %v343
    %458 = vmatpush.xpose.msra.mxu0 %v337
    %459 = vmatpush.xpose.msra.mxu0 %v331
    %460 = vmatpush.xpose.msra.mxu0 %v325
    %461 = vmatpush.xpose.msra.mxu0 %v319
    %462 = vmatpush.xpose.msra.mxu0 %v313
    %463 = vmatpush.xpose.msra.mxu0 %v307
    %464 = vmatpush.xpose.msra.mxu0 %v301
    %465 = vmatpush.xpose.msra.mxu0 %v295
    %466 = vmatpush.xpose.msra.mxu0 %v289
    %467 = vmatpush.xpose.msra.mxu0 %v283
    %468 = vmatpush.xpose.msra.mxu0 %v277
    %469 = vmatmul.f32.gmra.mxu0 %v271
    %v470 = vpop.f32.mrf.mxu0
    %v471 = vadd.f32 %v451, %v470
    %472 = vdwg.mxu0
    %473 = vmatpush.xpose.msra.mxu0 %v368
    %474 = vmatpush.xpose.msra.mxu0 %v362
    %475 = vmatpush.xpose.msra.mxu0 %v356
    %476 = vmatpush.xpose.msra.mxu0 %v350
    %477 = vmatpush.xpose.msra.mxu0 %v344
    %478 = vmatpush.xpose.msra.mxu0 %v338
    %479 = vmatpush.xpose.msra.mxu0 %v332
    %480 = vmatpush.xpose.msra.mxu0 %v326
    %481 = vmatpush.xpose.msra.mxu0 %v320
    %482 = vmatpush.xpose.msra.mxu0 %v314
    %483 = vmatpush.xpose.msra.mxu0 %v308
    %484 = vmatpush.xpose.msra.mxu0 %v302
    %485 = vmatpush.xpose.msra.mxu0 %v296
    %486 = vmatpush.xpose.msra.mxu0 %v290
    %487 = vmatpush.xpose.msra.mxu0 %v284
    %488 = vmatpush.xpose.msra.mxu0 %v278
    %489 = vmatmul.f32.gmra.mxu0 %v272
    %v490 = vpop.f32.mrf.mxu0
    %v491 = vadd.f32 %v471, %v490
    %492 = vdwg.mxu0
    %493 = vst [vmem:[#allocation10] sm:$0x3] %v491
    // Predicated region
    $region38: #{tpu_custom_call.1} parent=1 // pred_check
      _
    $region39: #{tpu_custom_call.1} parent=1 // pred_check_branch
      %495 = sbr.rel (0) target = $region41
    $region40: #{tpu_custom_call.1} parent=1 // pred_region
      %497 = vsyncadd [#allocation4], 0
      %s499 = sshll.u32 [#allocation10], 4
      %s500 = int_to_ptr.vmem [resolvable:$true] %s499
      %s501 = sshll.u32 %s5, 4
      %s502 = int_to_ptr.hbm [resolvable:$true] %s501
      %504 = dma.vmem_to_hbm [thread:$0]  %s500, 32, %s502, [#allocation4]
    $region41: #{tpu_custom_call.1} parent=1 // pred_fallthru
      _
    // Predicated region
    $region42: #{tpu_custom_call.1} parent=1 // pred_check
      _
    $region43: #{tpu_custom_call.1} parent=1 // pred_check_branch
      %506 = sbr.rel (0) target = $region45
    $region44: #{tpu_custom_call.1} parent=1 // pred_region
      %508 = dma.done [#allocation4], 32
    $region45: #{tpu_custom_call.1} parent=1 // pred_fallthru
      _
    %509 = vsyncpa [#allocation3], 1
    %510 = vsyncpa [#allocation6], 1
    %511 = vsyncpa [#allocation9], 1
    %512 = vsyncpa [#allocation4], 1

</llo_original>
